<compile_context>
chip_gen: v5e
topology: v5e:2x2
jax: 0.10.0
libtpu: 0.0.40
codegen_flags: <defaults>
</compile_context>

<pallas_src>
import functools

import jax
import jax.numpy as jnp
import numpy as np
from jax import lax
from jax.experimental import pallas as pl
from jax.experimental.pallas import tpu as pltpu


def _round_up(a, b):
    return (a + b - 1) // b * b


def _vmem_limit_bytes():
    """Scoped-VMEM budget for this kernel, gated on the actual chip."""
    phys = 64 * 1024 * 1024  # conservative fallback: v7x-class 64 MiB
    try:
        info = pltpu.get_tpu_info()
        phys = int(getattr(info, "vmem_capacity_bytes", phys)) or phys
    except Exception:
        pass
    # 25% headroom for Mosaic internals; cap at 96 MiB even on 128 MiB parts.
    return min(phys * 3 // 4, 96 * 1024 * 1024)


def _largest_divisor_leq(n, cap):
    cap = max(1, min(n, cap))
    for d in range(cap, 0, -1):
        if n % d == 0:
            return d
    return 1


# ---------------------------------------------------------------------------
# Kernels
# ---------------------------------------------------------------------------
def _maxpool_kernel_fused(hw, w, x_ref, col_ref, o_ref):
    """Lane-dense layout: one plane = one row of H*W lanes."""
    x = x_ref[...]                                        # (TB, HW)
    idx = lax.broadcasted_iota(jnp.int32, (1, hw), 1)
    last_row = idx >= hw - w                              # i == H-1
    last_col = col_ref[...] == (w - 1)                    # j == W-1 (precomputed j)

    # Row-below neighbour x[i+1, j] == fused index k + W (wrap masked out).
    x_dn = pltpu.roll(x, shift=hw - w, axis=1)            # roll by -W
    m = jnp.where(last_row, x, jnp.maximum(x, x_dn))
    # Column-right neighbour m[i, j+1] == fused index k + 1 (wrap masked out).
    m_rt = pltpu.roll(m, shift=hw - 1, axis=1)            # roll by -1
    o_ref[...] = jnp.where(last_col, m, jnp.maximum(m, m_rt))


def _maxpool_kernel_3d(x_ref, o_ref):
    """Plane layout (TB, H, W): H on sublanes, W on lanes."""
    x = x_ref[...]
    _, h, w = x.shape
    last_row = lax.broadcasted_iota(jnp.int32, (1, h, 1), 1) == h - 1
    last_col = lax.broadcasted_iota(jnp.int32, (1, 1, w), 2) == w - 1

    x_dn = pltpu.roll(x, shift=h - 1, axis=1)             # x[:, (i+1) % H, :]
    m = jnp.where(last_row, x, jnp.maximum(x, x_dn))
    m_rt = pltpu.roll(m, shift=w - 1, axis=2)             # m[:, :, (j+1) % W]
    o_ref[...] = jnp.where(last_col, m, jnp.maximum(m, m_rt))


# ---------------------------------------------------------------------------
# pallas_call wrappers
# ---------------------------------------------------------------------------
def _call_fused(xf, colidx, nc, hw, w, tb, vmem_limit):
    grid = nc // tb
    return pl.pallas_call(
        functools.partial(_maxpool_kernel_fused, hw, w),
        out_shape=jax.ShapeDtypeStruct((nc, hw), xf.dtype),
        grid_spec=pltpu.PrefetchScalarGridSpec(
            num_scalar_prefetch=0,
            grid=(grid,),
            in_specs=[pl.BlockSpec((tb, hw), lambda i: (i, 0)),
                      pl.BlockSpec((1, hw), lambda i: (0, 0))],
            out_specs=pl.BlockSpec((tb, hw), lambda i: (i, 0)),
        ),
        compiler_params=pltpu.CompilerParams(
            dimension_semantics=("parallel",),
            vmem_limit_bytes=vmem_limit,
        ),
    )(xf, colidx)


def _call_3d(xf, nc, h, w, tb, vmem_limit):
    grid = nc // tb
    return pl.pallas_call(
        _maxpool_kernel_3d,
        out_shape=jax.ShapeDtypeStruct((nc, h, w), xf.dtype),
        grid_spec=pltpu.PrefetchScalarGridSpec(
            num_scalar_prefetch=0,
            grid=(grid,),
            in_specs=[pl.BlockSpec((tb, h, w), lambda i: (i, 0, 0))],
            out_specs=pl.BlockSpec((tb, h, w), lambda i: (i, 0, 0)),
        ),
        compiler_params=pltpu.CompilerParams(
            dimension_semantics=("parallel",),
            vmem_limit_bytes=vmem_limit,
        ),
    )(xf)


def max_pool_stride1(x, *,
                     target_hbm_tile_bytes=8 << 20,     # ~8 MiB HBM per grid step
                     vmem_tile_budget_bytes=None):      # None -> derive from chip
    """x: (N, C, H, W) -> (N, C, H, W), replicate-pad 2x2 max pool, stride 1."""
    N, C, H, W = x.shape
    NC, HW = N * C, H * W
    itemsize = x.dtype.itemsize
    sub_mult = 8 * max(1, 4 // itemsize)                 # 8 f32 / 16 bf16 / 32 int8

    vmem_limit = _vmem_limit_bytes()
    if vmem_tile_budget_bytes is None:
        # in + out, double-buffered = 4 live tile buffers, plus headroom.
        vmem_tile_budget_bytes = vmem_limit // 5

    plane_hbm = HW * itemsize

    # Lane-dense fused layout is only used when it actually removes lane
    # padding (W % 128 != 0) and the fused lane extent is rotate-friendly.
    lane_ok = HW <= 128 or HW % 128 == 0
    use_fused = (W % 128 != 0) and lane_ok
    tb_fused = 0
    if use_fused:
        plane_vmem = _round_up(HW, 128) * itemsize
        cap = min(NC,
                  max(1, target_hbm_tile_bytes // plane_hbm),
                  max(1, vmem_tile_budget_bytes // plane_vmem))
        if cap >= NC:
            tb_fused = NC                                # whole axis: always legal
        else:
            d = (cap // sub_mult) * sub_mult             # sublane-aligned blocks only
            while d >= sub_mult:
                if NC % d == 0:
                    tb_fused = d
                    break
                d -= sub_mult
            if tb_fused == 0:                            # no aligned divisor
                use_fused = False

    if use_fused:
        xf = x.reshape(NC, HW)                           # free: contiguous merge
        colidx = (jnp.arange(HW, dtype=jnp.int32) % W).reshape(1, HW)
        try:
            out = _call_fused(xf, colidx, NC, HW, W, tb_fused, vmem_limit)
            return out.reshape(N, C, H, W)
        except Exception:
            pass  # fall back to the proven plane layout below

    # Plane (NC, H, W) layout: last two block dims are the full H, W, so any
    # TB that divides NC is a legal block -> no pad / slice tail needed.
    plane_vmem = _round_up(H, sub_mult) * _round_up(W, 128) * itemsize
    cap = min(NC,
              max(1, target_hbm_tile_bytes // plane_hbm),
              max(1, vmem_tile_budget_bytes // plane_vmem))
    tb = _largest_divisor_leq(NC, cap)
    xf = x.reshape(NC, H, W)
    out = _call_3d(xf, NC, H, W, tb, vmem_limit)
    return out.reshape(N, C, H, W)


# ---------------------------------------------------------------------------
# Reference & tests
# ---------------------------------------------------------------------------
def _reference(x):
    # Pure-JAX reference: replicate-pad right/bottom then 2x2 max, stride 1.
    xp = jnp.pad(x, ((0, 0), (0, 0), (0, 1), (0, 1)), mode="edge")
    return jnp.maximum(
        jnp.maximum(xp[:, :, :-1, :-1], xp[:, :, :-1, 1:]),
        jnp.maximum(xp[:, :, 1:, :-1], xp[:, :, 1:, 1:]),
    )


def _check(x, **kwargs):
    y = jax.block_until_ready(max_pool_stride1(x, **kwargs))
    y_ref = jax.block_until_ready(_reference(x))
    assert y.shape == x.shape and y.dtype == x.dtype
    np.testing.assert_allclose(np.asarray(y).astype(np.float32),
                               np.asarray(y_ref).astype(np.float32),
                               rtol=0, atol=0)


if __name__ == "__main__":
    key = jax.random.PRNGKey(0)
    k1, k2, k3, k4 = jax.random.split(key, 4)

    # Main path: fused lane-dense layout, single block (NC=8, HW=256).
    x = jax.random.normal(k1, (2, 4, 16, 16), dtype=jnp.float32)
    _check(x)

    # Forced tiny tile -> no sublane-aligned divisor -> plane layout, grid=2.
    _check(x, target_hbm_tile_bytes=4 * 16 * 16 * 4)

    # Fused layout with a multi-step grid (NC=32, tb=8, grid=4).
    x2 = jax.random.normal(k2, (2, 16, 16, 16), dtype=jnp.float32)
    _check(x2, target_hbm_tile_bytes=8 * 16 * 16 * 4)

    # Odd spatial dims (H, W not multiples of 8/128; HW=63 < 128), NC=6.
    x3 = jax.random.normal(k3, (2, 3, 7, 9), dtype=jnp.float32)
    _check(x3)

    # bf16 input: dtype preserved end-to-end; max is a selection, so exact.
    _check(x.astype(jnp.bfloat16))

    # W already a multiple of 128 -> plane layout with dense lanes.
    x4 = jax.random.normal(k4, (1, 2, 8, 128), dtype=jnp.float32)
    _check(x4)

    print("KERNEL_OK")
</pallas_src>

<mosaic_0001>
module attributes {stable_mosaic.version = 11 : i64} {
  func.func @_maxpool_kernel_fused(%arg0: i32, %arg1: memref<8x256xf32, #tpu.memory_space<vmem>>, %arg2: memref<1x256xi32, #tpu.memory_space<vmem>>, %arg3: memref<8x256xf32, #tpu.memory_space<vmem>>) attributes {dimension_semantics = [#tpu.dimension_semantics<parallel>], iteration_bounds = array<i64: 1>, scalar_prefetch = 0 : i64, scratch_operands = 0 : i64, tpu.core_type = #tpu.core_type<tc>, window_params = [{transform_indices = @transform_0, window_bounds = array<i64: 8, 256>}, {pipeline_mode = #tpu.pipeline_mode<synchronous>, transform_indices = @transform_1, window_bounds = array<i64: 1, 256>}, {transform_indices = @transform_2, window_bounds = array<i64: 8, 256>}]} {
    %c0 = arith.constant 0 : index
    %c0_0 = arith.constant 0 : index
    %0 = vector.load %arg1[%c0, %c0_0] : memref<8x256xf32, #tpu.memory_space<vmem>>, vector<8x256xf32>
    %1 = tpu.iota {dimensions = array<i32: 1>} : vector<1x256xi32>
    %c240_i32 = arith.constant 240 : i32
    %2 = vector.broadcast %c240_i32 : i32 to vector<1x256xi32>
    %3 = arith.cmpi sge, %1, %2 : vector<1x256xi32>
    %c0_1 = arith.constant 0 : index
    %c0_2 = arith.constant 0 : index
    %4 = vector.load %arg2[%c0_1, %c0_2] : memref<1x256xi32, #tpu.memory_space<vmem>>, vector<1x256xi32>
    %c15_i32 = arith.constant 15 : i32
    %5 = vector.broadcast %c15_i32 : i32 to vector<1x256xi32>
    %6 = arith.cmpi eq, %4, %5 : vector<1x256xi32>
    %c240_i32_3 = arith.constant 240 : i32
    %7 = tpu.dynamic_rotate %0 by %c240_i32_3 dim 1 : vector<8x256xf32>, i32 -> vector<8x256xf32>
    %8 = arith.maximumf %0, %7 : vector<8x256xf32>
    %9 = vector.shape_cast %3 : vector<1x256xi1> to vector<1x256xi1>
    %10 = vector.broadcast %9 : vector<1x256xi1> to vector<8x256xi1>
    %11 = arith.select %10, %0, %8 : vector<8x256xi1>, vector<8x256xf32>
    %c255_i32 = arith.constant 255 : i32
    %12 = tpu.dynamic_rotate %11 by %c255_i32 dim 1 : vector<8x256xf32>, i32 -> vector<8x256xf32>
    %13 = arith.maximumf %11, %12 : vector<8x256xf32>
    %14 = vector.shape_cast %6 : vector<1x256xi1> to vector<1x256xi1>
    %15 = vector.broadcast %14 : vector<1x256xi1> to vector<8x256xi1>
    %16 = arith.select %15, %11, %13 : vector<8x256xi1>, vector<8x256xf32>
    %c0_4 = arith.constant 0 : index
    %c0_5 = arith.constant 0 : index
    %17 = vector.load %arg3[%c0_4, %c0_5] : memref<8x256xf32, #tpu.memory_space<vmem>>, vector<8x256xf32>
    tpu.vector_store %arg3[%c0_4, %c0_5], %16 {strides = array<i32>} : memref<8x256xf32, #tpu.memory_space<vmem>>, vector<8x256xf32>,
    return
  }
  func.func @transform_0(%arg0: i32) -> (i32, i32) {
    %c0_i32 = arith.constant 0 : i32
    %c0_i32_0 = arith.constant 0 : i32
    return %arg0, %c0_i32 : i32, i32
  }
  func.func @transform_1(%arg0: i32) -> (i32, i32) {
    %c0_i32 = arith.constant 0 : i32
    %c0_i32_0 = arith.constant 0 : i32
    %c0_i32_1 = arith.constant 0 : i32
    return %c0_i32, %c0_i32_0 : i32, i32
  }
  func.func @transform_2(%arg0: i32) -> (i32, i32) {
    %c0_i32 = arith.constant 0 : i32
    %c0_i32_0 = arith.constant 0 : i32
    return %arg0, %c0_i32 : i32, i32
  }
}

module attributes {stable_mosaic.version = 11 : i64} {
  func.func @_maxpool_kernel_3d(%arg0: i32, %arg1: memref<8x16x16xf32, #tpu.memory_space<vmem>>, %arg2: memref<8x16x16xf32, #tpu.memory_space<vmem>>) attributes {dimension_semantics = [#tpu.dimension_semantics<parallel>], iteration_bounds = array<i64: 1>, scalar_prefetch = 0 : i64, scratch_operands = 0 : i64, tpu.core_type = #tpu.core_type<tc>, window_params = [{transform_indices = @transform_0, window_bounds = array<i64: 8, 16, 16>}, {transform_indices = @transform_1, window_bounds = array<i64: 8, 16, 16>}]} {
    %c0 = arith.constant 0 : index
    %c0_0 = arith.constant 0 : index
    %c0_1 = arith.constant 0 : index
    %0 = vector.load %arg1[%c0, %c0_0, %c0_1] : memref<8x16x16xf32, #tpu.memory_space<vmem>>, vector<8x16x16xf32>
    %1 = tpu.iota {dimensions = array<i32: 1>} : vector<1x16x1xi32>
    %c15_i32 = arith.constant 15 : i32
    %2 = vector.broadcast %c15_i32 : i32 to vector<1x16x1xi32>
    %3 = arith.cmpi eq, %1, %2 : vector<1x16x1xi32>
    %4 = tpu.iota {dimensions = array<i32: 2>} : vector<1x1x16xi32>
    %c15_i32_2 = arith.constant 15 : i32
    %5 = vector.broadcast %c15_i32_2 : i32 to vector<1x1x16xi32>
    %6 = arith.cmpi eq, %4, %5 : vector<1x1x16xi32>
    %c15_i32_3 = arith.constant 15 : i32
    %7 = tpu.dynamic_rotate %0 by %c15_i32_3 dim 1 : vector<8x16x16xf32>, i32 -> vector<8x16x16xf32>
    %8 = arith.maximumf %0, %7 : vector<8x16x16xf32>
    %9 = vector.shape_cast %3 : vector<1x16x1xi1> to vector<1x16x1xi1>
    %10 = vector.broadcast %9 : vector<1x16x1xi1> to vector<8x16x16xi1>
    %11 = arith.select %10, %0, %8 : vector<8x16x16xi1>, vector<8x16x16xf32>
    %c15_i32_4 = arith.constant 15 : i32
    %12 = tpu.dynamic_rotate %11 by %c15_i32_4 dim 2 : vector<8x16x16xf32>, i32 -> vector<8x16x16xf32>
    %13 = arith.maximumf %11, %12 : vector<8x16x16xf32>
    %14 = vector.shape_cast %6 : vector<1x1x16xi1> to vector<1x1x16xi1>
    %15 = vector.broadcast %14 : vector<1x1x16xi1> to vector<8x16x16xi1>
    %16 = arith.select %15, %11, %13 : vector<8x16x16xi1>, vector<8x16x16xf32>
    %c0_5 = arith.constant 0 : index
    %c0_6 = arith.constant 0 : index
    %c0_7 = arith.constant 0 : index
    %17 = vector.load %arg2[%c0_5, %c0_6, %c0_7] : memref<8x16x16xf32, #tpu.memory_space<vmem>>, vector<8x16x16xf32>
    tpu.vector_store %arg2[%c0_5, %c0_6, %c0_7], %16 {strides = array<i32>} : memref<8x16x16xf32, #tpu.memory_space<vmem>>, vector<8x16x16xf32>,
    return
  }
  func.func @transform_0(%arg0: i32) -> (i32, i32, i32) {
    %c0_i32 = arith.constant 0 : i32
    %c0_i32_0 = arith.constant 0 : i32
    %c0_i32_1 = arith.constant 0 : i32
    return %arg0, %c0_i32, %c0_i32_0 : i32, i32, i32
  }
  func.func @transform_1(%arg0: i32) -> (i32, i32, i32) {
    %c0_i32 = arith.constant 0 : i32
    %c0_i32_0 = arith.constant 0 : i32
    %c0_i32_1 = arith.constant 0 : i32
    return %arg0, %c0_i32, %c0_i32_0 : i32, i32, i32
  }
}

</mosaic_0001>

<llo_original>
// kernel: tpu_custom_call.1
$region0: #{tpu_custom_call.1}
  #allocation0 [shape = 'u32[]', space=smem, size = 0x4, offset = 0x4, fixed_abs, tag = 'smem constant byte address 0x4 - core index']
  #allocation1 [shape = 'u32[72,128]{1,0:T(1,128)}', space=vmem, size = 0x9000, scoped, tag = 'internal scratch']
  %s0 = inlined_call_operand.hbm [shape: f32[8,256], index: 0, kind: input, shape index: {}]
  %s1 = inlined_call_operand.hbm [shape: s32[1,256], index: 1, kind: input, shape index: {}]
  %s2 = inlined_call_operand.hbm [shape: f32[8,256], index: 2, kind: output, shape index: {}]
  %s3 = sld [smem:[#allocation0]]
  $region26: #{tpu_custom_call.1} parent=0
    _
  %s5 = ssub.s32 1, %s3
  %s6 = scalar_select 0, %s5, %s3
  $region1: #{tpu_custom_call.1} parent=0
    #allocation2 [shape = 'u8[8192]{0}', space=vmem, size = 0x2000, scoped, tag = 'input window, operand 0, single buffered']
    #allocation3 [shape = 's32[1]{0}', space=sflag, size = 0x4, scoped, tag = 'scoped memory for tpu_custom_call.1']
    #allocation4 [shape = 's32[1]{0}', space=sflag, size = 0x4, scoped, tag = 'scoped memory for tpu_custom_call.1']
    #allocation5 [shape = 'u8[1024]{0}', space=vmem, size = 0x400, scoped, tag = 'input window, operand 1, single buffered']
    #allocation6 [shape = 's32[1]{0}', space=sflag, size = 0x4, scoped, tag = 'scoped memory for tpu_custom_call.1']
    #allocation7 [shape = 'u8[8192]{0}', space=vmem, size = 0x2000, scoped, tag = 'output window, operand 0, single buffered']
    %7 = vsyncpa [#allocation3], 0
    %8 = vsyncpa [#allocation6], 0
    %9 = vsyncpa [#allocation4], 0
    // Predicated region
    $region2: #{tpu_custom_call.1} parent=1 // pred_check
      _
    $region3: #{tpu_custom_call.1} parent=1 // pred_check_branch
      %11 = sbr.rel (0) target = $region5
    $region4: #{tpu_custom_call.1} parent=1 // pred_region
      %13 = vsyncadd [#allocation3], 0
      %s15 = sshll.u32 %s0, 4
      %s16 = int_to_ptr.hbm [resolvable:$true] %s15
      %s17 = sshll.u32 [#allocation2], 4
      %s18 = int_to_ptr.vmem [resolvable:$true] %s17
      %20 = dma.hbm_to_vmem [thread:$0]  %s16, 256, %s18, [#allocation3]
    $region5: #{tpu_custom_call.1} parent=1 // pred_fallthru
      _
    // Predicated region
    $region6: #{tpu_custom_call.1} parent=1 // pred_check
      _
    $region7: #{tpu_custom_call.1} parent=1 // pred_check_branch
      %22 = sbr.rel (0) target = $region9
    $region8: #{tpu_custom_call.1} parent=1 // pred_region
      %24 = vsyncadd [#allocation6], 0
      %s26 = sshll.u32 %s1, 4
      %s27 = int_to_ptr.hbm [resolvable:$true] %s26
      %s28 = sshll.u32 [#allocation5], 4
      %s29 = int_to_ptr.vmem [resolvable:$true] %s28
      %31 = dma.hbm_to_vmem [thread:$0]  %s27, 32, %s29, [#allocation6]
    $region9: #{tpu_custom_call.1} parent=1 // pred_fallthru
      _
    // Predicated region
    $region10: #{tpu_custom_call.1} parent=1 // pred_check
      _
    $region11: #{tpu_custom_call.1} parent=1 // pred_check_branch
      %33 = sbr.rel (0) target = $region13
    $region12: #{tpu_custom_call.1} parent=1 // pred_region
      %35 = dma.done [#allocation3], 256
    $region13: #{tpu_custom_call.1} parent=1 // pred_fallthru
      _
    // Predicated region
    $region14: #{tpu_custom_call.1} parent=1 // pred_check
      _
    $region15: #{tpu_custom_call.1} parent=1 // pred_check_branch
      %37 = sbr.rel (0) target = $region17
    $region16: #{tpu_custom_call.1} parent=1 // pred_region
      %39 = dma.done [#allocation6], 32
    $region17: #{tpu_custom_call.1} parent=1 // pred_fallthru
      _
    %v40 = vld [vmem:[#allocation2] sm:$0xff]
    %v41 = vld [vmem:[#allocation2 + $0x8] sm:$0xff]
    %v42 = vlaneseq
    %v43 = vand.u32 %v42, 127
    %v44 = vadd.s32 %v43, 128
    %vm45 = vcmp.ge.s32.totalorder %v43, 240
    %vm46 = vcmp.ge.s32.totalorder %v44, 240
    %v47 = vld [vmem:[#allocation5] sm:$0x3]
    %vm48 = vcmp.eq.s32.totalorder %v47, 15
    %49 = vrot.lane.b32.xlu0 %v40, 112
    %v50 = vpop.permute.xlu0 %49
    %51 = vrot.lane.b32.xlu0 %v41, 112
    %v52 = vpop.permute.xlu0 %51
    %vm53 = vcmp.lt.s32.totalorder %v43, 112
    %v54 = vsel %vm53, %v50, %v52
    %v55 = vsel %vm53, %v52, %v50
    %v56 = vmax.f32 %v40, %v54
    %v57 = vmax.f32 %v41, %v55
    %v58 = vsel %vm45, 1, 0
    %v59 = vsel %vm46, 1, 0
    %vm60 = vcmp.eq.s32.totalorder %v58, 1
    %vm61 = vcmp.eq.s32.totalorder %v59, 1
    %v62 = vsel %vm60, %v40, %v56
    %v63 = vsel %vm61, %v41, %v57
    %64 = vrot.lane.b32.xlu0 %v62, 127
    %v65 = vpop.permute.xlu0 %64
    %66 = vrot.lane.b32.xlu0 %v63, 127
    %v67 = vpop.permute.xlu0 %66
    %vm68 = vcmp.lt.s32.totalorder %v43, 127
    %v69 = vsel %vm68, %v65, %v67
    %v70 = vsel %vm68, %v67, %v65
    %v71 = vmax.f32 %v62, %v69
    %v72 = vmax.f32 %v63, %v70
    %v73 = vsel %vm48, 1, 0
    %v74 = vperm.slane %v73, 0
    %v75 = vperm.slane %v73, 1
    %vm76 = vcmp.eq.s32.totalorder %v74, 1
    %vm77 = vcmp.eq.s32.totalorder %v75, 1
    %v78 = vsel %vm76, %v62, %v71
    %v79 = vsel %vm77, %v63, %v72
    %80 = vst [vmem:[#allocation7] sm:$0xff] %v78
    %81 = vst [vmem:[#allocation7 + $0x8] sm:$0xff] %v79
    // Predicated region
    $region18: #{tpu_custom_call.1} parent=1 // pred_check
      _
    $region19: #{tpu_custom_call.1} parent=1 // pred_check_branch
      %83 = sbr.rel (0) target = $region21
    $region20: #{tpu_custom_call.1} parent=1 // pred_region
      %85 = vsyncadd [#allocation4], 0
      %s87 = sshll.u32 [#allocation7], 4
      %s88 = int_to_ptr.vmem [resolvable:$true] %s87
      %s89 = sshll.u32 %s2, 4
      %s90 = int_to_ptr.hbm [resolvable:$true] %s89
      %92 = dma.vmem_to_hbm [thread:$0]  %s88, 256, %s90, [#allocation4]
    $region21: #{tpu_custom_call.1} parent=1 // pred_fallthru
      _
    // Predicated region
    $region22: #{tpu_custom_call.1} parent=1 // pred_check
      _
    $region23: #{tpu_custom_call.1} parent=1 // pred_check_branch
      %94 = sbr.rel (0) target = $region25
    $region24: #{tpu_custom_call.1} parent=1 // pred_region
      %96 = dma.done [#allocation4], 256
    $region25: #{tpu_custom_call.1} parent=1 // pred_fallthru
      _
    %97 = vsyncpa [#allocation3], 1
    %98 = vsyncpa [#allocation6], 1
    %99 = vsyncpa [#allocation4], 1

// kernel: tpu_custom_call.1
$region0: #{tpu_custom_call.1}
  #allocation0 [shape = 'u32[]', space=smem, size = 0x4, offset = 0x4, fixed_abs, tag = 'smem constant byte address 0x4 - core index']
  #allocation1 [shape = 'u32[72,128]{1,0:T(1,128)}', space=vmem, size = 0x9000, scoped, tag = 'internal scratch']
  %s0 = inlined_call_operand.hbm [shape: f32[8,16,16], index: 0, kind: input, shape index: {}]
  %s1 = inlined_call_operand.hbm [shape: f32[8,16,16], index: 1, kind: output, shape index: {}]
  %s2 = sld [smem:[#allocation0]]
  $region18: #{tpu_custom_call.1} parent=0
    _
  %s4 = ssub.s32 1, %s2
  %s5 = scalar_select 0, %s4, %s2
  $region1: #{tpu_custom_call.1} parent=0
    #allocation2 [shape = 'u8[65536]{0}', space=vmem, size = 0x10000, scoped, tag = 'input window, operand 0, single buffered']
    #allocation3 [shape = 's32[1]{0}', space=sflag, size = 0x4, scoped, tag = 'scoped memory for tpu_custom_call.1']
    #allocation4 [shape = 's32[1]{0}', space=sflag, size = 0x4, scoped, tag = 'scoped memory for tpu_custom_call.1']
    #allocation5 [shape = 'u8[65536]{0}', space=vmem, size = 0x10000, scoped, tag = 'output window, operand 0, single buffered']
    %6 = vsyncpa [#allocation3], 0
    %7 = vsyncpa [#allocation4], 0
    // Predicated region
    $region2: #{tpu_custom_call.1} parent=1 // pred_check
      _
    $region3: #{tpu_custom_call.1} parent=1 // pred_check_branch
      %9 = sbr.rel (0) target = $region5
    $region4: #{tpu_custom_call.1} parent=1 // pred_region
      %11 = vsyncadd [#allocation3], 0
      %s12 = sshll.u32 %s0, 4
      %s13 = int_to_ptr.hbm [resolvable:$true] %s12
      %s14 = sshll.u32 [#allocation2], 4
      %s15 = int_to_ptr.vmem [resolvable:$true] %s14
      %20 = dma.hbm_to_vmem [thread:$0]  %s13, 2048, %s15, [#allocation3], 128, 128, 8
    $region5: #{tpu_custom_call.1} parent=1 // pred_fallthru
      _
    // Predicated region
    $region6: #{tpu_custom_call.1} parent=1 // pred_check
      _
    $region7: #{tpu_custom_call.1} parent=1 // pred_check_branch
      %22 = sbr.rel (0) target = $region9
    $region8: #{tpu_custom_call.1} parent=1 // pred_region
      %24 = dma.done [#allocation3], 2048
    $region9: #{tpu_custom_call.1} parent=1 // pred_fallthru
      _
    %v25 = vld [vmem:[#allocation2] sm:$0xff]
    %v26 = vld [vmem:[#allocation2 + $0x8] sm:$0xff]
    %v27 = vld [vmem:[#allocation2 + $0x10] sm:$0xff]
    %v28 = vld [vmem:[#allocation2 + $0x18] sm:$0xff]
    %v29 = vld [vmem:[#allocation2 + $0x20] sm:$0xff]
    %v30 = vld [vmem:[#allocation2 + $0x28] sm:$0xff]
    %v31 = vld [vmem:[#allocation2 + $0x30] sm:$0xff]
    %v32 = vld [vmem:[#allocation2 + $0x38] sm:$0xff]
    %v33 = vld [vmem:[#allocation2 + $0x40] sm:$0xff]
    %v34 = vld [vmem:[#allocation2 + $0x48] sm:$0xff]
    %v35 = vld [vmem:[#allocation2 + $0x50] sm:$0xff]
    %v36 = vld [vmem:[#allocation2 + $0x58] sm:$0xff]
    %v37 = vld [vmem:[#allocation2 + $0x60] sm:$0xff]
    %v38 = vld [vmem:[#allocation2 + $0x68] sm:$0xff]
    %v39 = vld [vmem:[#allocation2 + $0x70] sm:$0xff]
    %v40 = vld [vmem:[#allocation2 + $0x78] sm:$0xff]
    %v41 = vlaneseq
    %v42 = vshrl.u32 %v41, 7
    %v43 = vadd.s32 %v42, 8
    %vm44 = vcmp.eq.s32.totalorder %v42, 15
    %vm45 = vcmp.eq.s32.totalorder %v43, 15
    %v46 = vlaneseq
    %v47 = vand.u32 %v46, 127
    %vm48 = vcmp.eq.s32.totalorder %v47, 15
    %v49 = vrot.slane %v25, 1
    %v50 = vrot.slane %v27, 1
    %v51 = vrot.slane %v29, 1
    %v52 = vrot.slane %v31, 1
    %v53 = vrot.slane %v33, 1
    %v54 = vrot.slane %v35, 1
    %v55 = vrot.slane %v37, 1
    %v56 = vrot.slane %v39, 1
    %v57 = vrot.slane %v26, 1
    %v58 = vrot.slane %v28, 1
    %v59 = vrot.slane %v30, 1
    %v60 = vrot.slane %v32, 1
    %v61 = vrot.slane %v34, 1
    %v62 = vrot.slane %v36, 1
    %v63 = vrot.slane %v38, 1
    %v64 = vrot.slane %v40, 1
    %vm65 = vcmp.lt.s32.totalorder %v42, 7
    %v66 = vsel %vm65, %v49, %v57
    %v67 = vsel %vm65, %v50, %v58
    %v68 = vsel %vm65, %v51, %v59
    %v69 = vsel %vm65, %v52, %v60
    %v70 = vsel %vm65, %v53, %v61
    %v71 = vsel %vm65, %v54, %v62
    %v72 = vsel %vm65, %v55, %v63
    %v73 = vsel %vm65, %v56, %v64
    %v74 = vsel %vm65, %v57, %v49
    %v75 = vsel %vm65, %v58, %v50
    %v76 = vsel %vm65, %v59, %v51
    %v77 = vsel %vm65, %v60, %v52
    %v78 = vsel %vm65, %v61, %v53
    %v79 = vsel %vm65, %v62, %v54
    %v80 = vsel %vm65, %v63, %v55
    %v81 = vsel %vm65, %v64, %v56
    %v82 = vmax.f32 %v25, %v66
    %v83 = vmax.f32 %v26, %v74
    %v84 = vmax.f32 %v27, %v67
    %v85 = vmax.f32 %v28, %v75
    %v86 = vmax.f32 %v29, %v68
    %v87 = vmax.f32 %v30, %v76
    %v88 = vmax.f32 %v31, %v69
    %v89 = vmax.f32 %v32, %v77
    %v90 = vmax.f32 %v33, %v70
    %v91 = vmax.f32 %v34, %v78
    %v92 = vmax.f32 %v35, %v71
    %v93 = vmax.f32 %v36, %v79
    %v94 = vmax.f32 %v37, %v72
    %v95 = vmax.f32 %v38, %v80
    %v96 = vmax.f32 %v39, %v73
    %v97 = vmax.f32 %v40, %v81
    %v98 = vsel %vm44, 1, 0
    %v99 = vsel %vm45, 1, 0
    %vm100 = vcmp.eq.s32.totalorder %v98, 1
    %vm101 = vcmp.eq.s32.totalorder %v99, 1
    %v102 = vsel %vm100, %v25, %v82
    %v103 = vsel %vm101, %v26, %v83
    %v104 = vsel %vm100, %v27, %v84
    %v105 = vsel %vm101, %v28, %v85
    %v106 = vsel %vm100, %v29, %v86
    %v107 = vsel %vm101, %v30, %v87
    %v108 = vsel %vm100, %v31, %v88
    %v109 = vsel %vm101, %v32, %v89
    %v110 = vsel %vm100, %v33, %v90
    %v111 = vsel %vm101, %v34, %v91
    %v112 = vsel %vm100, %v35, %v92
    %v113 = vsel %vm101, %v36, %v93
    %v114 = vsel %vm100, %v37, %v94
    %v115 = vsel %vm101, %v38, %v95
    %v116 = vsel %vm100, %v39, %v96
    %v117 = vsel %vm101, %v40, %v97
    %vm118 = vcmask 1047680
    %119 = vrot.lane.b32.xlu0 %v102, 16
    %v120 = vpop.permute.xlu0 %119
    %v121 = vsel %vm118, %v120, %v102
    %122 = vrot.lane.b32.xlu0 %v103, 16
    %v123 = vpop.permute.xlu0 %122
    %v124 = vsel %vm118, %v123, %v103
    %125 = vrot.lane.b32.xlu0 %v104, 16
    %v126 = vpop.permute.xlu0 %125
    %v127 = vsel %vm118, %v126, %v104
    %128 = vrot.lane.b32.xlu0 %v105, 16
    %v129 = vpop.permute.xlu0 %128
    %v130 = vsel %vm118, %v129, %v105
    %131 = vrot.lane.b32.xlu0 %v106, 16
    %v132 = vpop.permute.xlu0 %131
    %v133 = vsel %vm118, %v132, %v106
    %134 = vrot.lane.b32.xlu0 %v107, 16
    %v135 = vpop.permute.xlu0 %134
    %v136 = vsel %vm118, %v135, %v107
    %137 = vrot.lane.b32.xlu0 %v108, 16
    %v138 = vpop.permute.xlu0 %137
    %v139 = vsel %vm118, %v138, %v108
    %140 = vrot.lane.b32.xlu0 %v109, 16
    %v141 = vpop.permute.xlu0 %140
    %v142 = vsel %vm118, %v141, %v109
    %143 = vrot.lane.b32.xlu0 %v110, 16
    %v144 = vpop.permute.xlu0 %143
    %v145 = vsel %vm118, %v144, %v110
    %146 = vrot.lane.b32.xlu0 %v111, 16
    %v147 = vpop.permute.xlu0 %146
    %v148 = vsel %vm118, %v147, %v111
    %149 = vrot.lane.b32.xlu0 %v112, 16
    %v150 = vpop.permute.xlu0 %149
    %v151 = vsel %vm118, %v150, %v112
    %152 = vrot.lane.b32.xlu0 %v113, 16
    %v153 = vpop.permute.xlu0 %152
    %v154 = vsel %vm118, %v153, %v113
    %155 = vrot.lane.b32.xlu0 %v114, 16
    %v156 = vpop.permute.xlu0 %155
    %v157 = vsel %vm118, %v156, %v114
    %158 = vrot.lane.b32.xlu0 %v115, 16
    %v159 = vpop.permute.xlu0 %158
    %v160 = vsel %vm118, %v159, %v115
    %161 = vrot.lane.b32.xlu0 %v116, 16
    %v162 = vpop.permute.xlu0 %161
    %v163 = vsel %vm118, %v162, %v116
    %164 = vrot.lane.b32.xlu0 %v117, 16
    %v165 = vpop.permute.xlu0 %164
    %v166 = vsel %vm118, %v165, %v117
    %167 = vrot.lane.b32.xlu0 %v121, 16
    %v168 = vpop.permute.xlu0 %167
    %169 = vrot.lane.b32.xlu0 %v124, 16
    %v170 = vpop.permute.xlu0 %169
    %171 = vrot.lane.b32.xlu0 %v127, 16
    %v172 = vpop.permute.xlu0 %171
    %173 = vrot.lane.b32.xlu0 %v130, 16
    %v174 = vpop.permute.xlu0 %173
    %175 = vrot.lane.b32.xlu0 %v133, 16
    %v176 = vpop.permute.xlu0 %175
    %177 = vrot.lane.b32.xlu0 %v136, 16
    %v178 = vpop.permute.xlu0 %177
    %179 = vrot.lane.b32.xlu0 %v139, 16
    %v180 = vpop.permute.xlu0 %179
    %181 = vrot.lane.b32.xlu0 %v142, 16
    %v182 = vpop.permute.xlu0 %181
    %183 = vrot.lane.b32.xlu0 %v145, 16
    %v184 = vpop.permute.xlu0 %183
    %185 = vrot.lane.b32.xlu0 %v148, 16
    %v186 = vpop.permute.xlu0 %185
    %187 = vrot.lane.b32.xlu0 %v151, 16
    %v188 = vpop.permute.xlu0 %187
    %189 = vrot.lane.b32.xlu0 %v154, 16
    %v190 = vpop.permute.xlu0 %189
    %191 = vrot.lane.b32.xlu0 %v157, 16
    %v192 = vpop.permute.xlu0 %191
    %193 = vrot.lane.b32.xlu0 %v160, 16
    %v194 = vpop.permute.xlu0 %193
    %195 = vrot.lane.b32.xlu0 %v163, 16
    %v196 = vpop.permute.xlu0 %195
    %197 = vrot.lane.b32.xlu0 %v166, 16
    %v198 = vpop.permute.xlu0 %197
    %v199 = vsel %vm118, %v168, %v102
    %v200 = vsel %vm118, %v170, %v103
    %v201 = vsel %vm118, %v172, %v104
    %v202 = vsel %vm118, %v174, %v105
    %v203 = vsel %vm118, %v176, %v106
    %v204 = vsel %vm118, %v178, %v107
    %v205 = vsel %vm118, %v180, %v108
    %v206 = vsel %vm118, %v182, %v109
    %v207 = vsel %vm118, %v184, %v110
    %v208 = vsel %vm118, %v186, %v111
    %v209 = vsel %vm118, %v188, %v112
    %v210 = vsel %vm118, %v190, %v113
    %v211 = vsel %vm118, %v192, %v114
    %v212 = vsel %vm118, %v194, %v115
    %v213 = vsel %vm118, %v196, %v116
    %v214 = vsel %vm118, %v198, %v117
    %231 = vrot.lane.b32.xlu0 %v199, 127
    %v232 = vpop.permute.xlu0 %231
    %233 = vrot.lane.b32.xlu0 %v200, 127
    %v234 = vpop.permute.xlu0 %233
    %235 = vrot.lane.b32.xlu0 %v201, 127
    %v236 = vpop.permute.xlu0 %235
    %237 = vrot.lane.b32.xlu0 %v202, 127
    %v238 = vpop.permute.xlu0 %237
    %239 = vrot.lane.b32.xlu0 %v203, 127
    %v240 = vpop.permute.xlu0 %239
    %241 = vrot.lane.b32.xlu0 %v204, 127
    %v242 = vpop.permute.xlu0 %241
    %243 = vrot.lane.b32.xlu0 %v205, 127
    %v244 = vpop.permute.xlu0 %243
    %245 = vrot.lane.b32.xlu0 %v206, 127
    %v246 = vpop.permute.xlu0 %245
    %247 = vrot.lane.b32.xlu0 %v207, 127
    %v248 = vpop.permute.xlu0 %247
    %249 = vrot.lane.b32.xlu0 %v208, 127
    %v250 = vpop.permute.xlu0 %249
    %251 = vrot.lane.b32.xlu0 %v209, 127
    %v252 = vpop.permute.xlu0 %251
    %253 = vrot.lane.b32.xlu0 %v210, 127
    %v254 = vpop.permute.xlu0 %253
    %255 = vrot.lane.b32.xlu0 %v211, 127
    %v256 = vpop.permute.xlu0 %255
    %257 = vrot.lane.b32.xlu0 %v212, 127
    %v258 = vpop.permute.xlu0 %257
    %259 = vrot.lane.b32.xlu0 %v213, 127
    %v260 = vpop.permute.xlu0 %259
    %261 = vrot.lane.b32.xlu0 %v214, 127
    %v262 = vpop.permute.xlu0 %261
    %v279 = vmax.f32 %v102, %v232
    %v280 = vmax.f32 %v103, %v234
    %v281 = vmax.f32 %v104, %v236
    %v282 = vmax.f32 %v105, %v238
    %v283 = vmax.f32 %v106, %v240
    %v284 = vmax.f32 %v107, %v242
    %v285 = vmax.f32 %v108, %v244
    %v286 = vmax.f32 %v109, %v246
    %v287 = vmax.f32 %v110, %v248
    %v288 = vmax.f32 %v111, %v250
    %v289 = vmax.f32 %v112, %v252
    %v290 = vmax.f32 %v113, %v254
    %v291 = vmax.f32 %v114, %v256
    %v292 = vmax.f32 %v115, %v258
    %v293 = vmax.f32 %v116, %v260
    %v294 = vmax.f32 %v117, %v262
    %v295 = vsel %vm48, 1, 0
    %vm296 = vcmp.eq.s32.totalorder %v295, 1
    %v297 = vsel %vm296, %v102, %v279
    %v298 = vsel %vm296, %v103, %v280
    %v299 = vsel %vm296, %v104, %v281
    %v300 = vsel %vm296, %v105, %v282
    %v301 = vsel %vm296, %v106, %v283
    %v302 = vsel %vm296, %v107, %v284
    %v303 = vsel %vm296, %v108, %v285
    %v304 = vsel %vm296, %v109, %v286
    %v305 = vsel %vm296, %v110, %v287
    %v306 = vsel %vm296, %v111, %v288
    %v307 = vsel %vm296, %v112, %v289
    %v308 = vsel %vm296, %v113, %v290
    %v309 = vsel %vm296, %v114, %v291
    %v310 = vsel %vm296, %v115, %v292
    %v311 = vsel %vm296, %v116, %v293
    %v312 = vsel %vm296, %v117, %v294
    %vm313 = vcmask 130048
    %314 = vst.msk [vmem:[#allocation5] sm:$0xff] %vm313, %v297
    %315 = vst.msk [vmem:[#allocation5 + $0x8] sm:$0xff] %vm313, %v298
    %316 = vst.msk [vmem:[#allocation5 + $0x10] sm:$0xff] %vm313, %v299
    %317 = vst.msk [vmem:[#allocation5 + $0x18] sm:$0xff] %vm313, %v300
    %318 = vst.msk [vmem:[#allocation5 + $0x20] sm:$0xff] %vm313, %v301
    %319 = vst.msk [vmem:[#allocation5 + $0x28] sm:$0xff] %vm313, %v302
    %320 = vst.msk [vmem:[#allocation5 + $0x30] sm:$0xff] %vm313, %v303
    %321 = vst.msk [vmem:[#allocation5 + $0x38] sm:$0xff] %vm313, %v304
    %322 = vst.msk [vmem:[#allocation5 + $0x40] sm:$0xff] %vm313, %v305
    %323 = vst.msk [vmem:[#allocation5 + $0x48] sm:$0xff] %vm313, %v306
    %324 = vst.msk [vmem:[#allocation5 + $0x50] sm:$0xff] %vm313, %v307
    %325 = vst.msk [vmem:[#allocation5 + $0x58] sm:$0xff] %vm313, %v308
    %326 = vst.msk [vmem:[#allocation5 + $0x60] sm:$0xff] %vm313, %v309
    %327 = vst.msk [vmem:[#allocation5 + $0x68] sm:$0xff] %vm313, %v310
    %328 = vst.msk [vmem:[#allocation5 + $0x70] sm:$0xff] %vm313, %v311
    %329 = vst.msk [vmem:[#allocation5 + $0x78] sm:$0xff] %vm313, %v312
    // Predicated region
    $region10: #{tpu_custom_call.1} parent=1 // pred_check
      _
    $region11: #{tpu_custom_call.1} parent=1 // pred_check_branch
      %331 = sbr.rel (0) target = $region13
    $region12: #{tpu_custom_call.1} parent=1 // pred_region
      %333 = vsyncadd [#allocation4], 0
      %s334 = sshll.u32 [#allocation5], 4
      %s335 = int_to_ptr.vmem [resolvable:$true] %s334
      %s336 = sshll.u32 %s1, 4
      %s337 = int_to_ptr.hbm [resolvable:$true] %s336
      %342 = dma.vmem_to_hbm [thread:$0]  %s335, 2048, %s337, [#allocation4], 128, 128, 8
    $region13: #{tpu_custom_call.1} parent=1 // pred_fallthru
      _
    // Predicated region
    $region14: #{tpu_custom_call.1} parent=1 // pred_check
      _
    $region15: #{tpu_custom_call.1} parent=1 // pred_check_branch
      %344 = sbr.rel (0) target = $region17
    $region16: #{tpu_custom_call.1} parent=1 // pred_region
      %346 = dma.done [#allocation4], 2048
    $region17: #{tpu_custom_call.1} parent=1 // pred_fallthru
      _
    %347 = vsyncpa [#allocation3], 1
    %348 = vsyncpa [#allocation4], 1

</llo_original>
